<compile_context>
chip_gen: v5e
topology: v5e:2x2
jax: 0.10.0
libtpu: 0.0.40
codegen_flags: <defaults>
</compile_context>

<pallas_src>
import jax
import jax.numpy as jnp
from jax.experimental import pallas as pl
from jax.experimental.pallas import tpu as pltpu


def _nconv_kernel_shared(a_ref, x_ref, o_ref):
    # a_ref: (V, W)   x_ref: (W, tf)   o_ref: (V, tf)
    o_ref[...] = jnp.dot(
        a_ref[...], x_ref[...], preferred_element_type=jnp.float32
    ).astype(o_ref.dtype)


def _nconv_kernel_batched(a_ref, x_ref, o_ref):
    # a_ref: (1, V, W)   x_ref: (1, W, tf)   o_ref: (1, V, tf)
    o_ref[0] = jnp.dot(
        a_ref[0], x_ref[0], preferred_element_type=jnp.float32
    ).astype(o_ref.dtype)


def _pick_f_tile(F, target=1024):
    """Largest multiple-of-128 divisor of F that is <= target, else F (full)."""
    if F <= target:
        return F
    for tf in range(target, 0, -128):
        if F % tf == 0:
            return tf
    return F


@jax.jit
def nconv(x, A):
    """Pallas TPU forward of MepoGNN's nconv.

    x: (N, C, W, L)
    A: (V, W) shared adjacency, or (N, V, W) per-sample adjacency
    returns: (N, C, V, L)
    """
    N, C, W, L = x.shape

    if A.ndim == 2:
        V = A.shape[0]
        # Fuse N, C, L into one lane-dense free dim: out = A @ x_flat.
        # x (N, C, W, L) -> (W, N, C, L) -> (W, N*C*L)
        F = N * C * L
        xr = jnp.transpose(x, (2, 0, 1, 3)).reshape(W, F)
        tf = _pick_f_tile(F)

        out_flat = pl.pallas_call(
            _nconv_kernel_shared,
            out_shape=jax.ShapeDtypeStruct((V, F), x.dtype),
            grid=(F // tf,),
            in_specs=[
                # Constant index_map -> A fetched once, VMEM-resident.
                pl.BlockSpec((V, W), lambda j: (0, 0)),
                pl.BlockSpec((W, tf), lambda j: (0, j)),
            ],
            out_specs=pl.BlockSpec((V, tf), lambda j: (0, j)),
            compiler_params=pltpu.CompilerParams(
                dimension_semantics=("parallel",),
            ),
        )(A, xr)

        # (V, N*C*L) -> (V, N, C, L) -> (N, C, V, L)
        return jnp.transpose(out_flat.reshape(V, N, C, L), (1, 2, 0, 3))

    else:
        V = A.shape[1]
        # Fuse C, L into the RHS free dim per sample.
        # x (N, C, W, L) -> (N, W, C, L) -> (N, W, C*L)
        F = C * L
        xr = jnp.transpose(x, (0, 2, 1, 3)).reshape(N, W, F)
        tf = _pick_f_tile(F)

        out_r = pl.pallas_call(
            _nconv_kernel_batched,
            out_shape=jax.ShapeDtypeStruct((N, V, F), x.dtype),
            grid=(N, F // tf),
            in_specs=[
                pl.BlockSpec((1, V, W), lambda n, j: (n, 0, 0)),
                pl.BlockSpec((1, W, tf), lambda n, j: (n, 0, j)),
            ],
            out_specs=pl.BlockSpec((1, V, tf), lambda n, j: (n, 0, j)),
            compiler_params=pltpu.CompilerParams(
                dimension_semantics=("parallel", "parallel"),
            ),
        )(A, xr)

        # (N, V, C*L) -> (N, V, C, L) -> (N, C, V, L)
        return jnp.transpose(out_r.reshape(N, V, C, L), (0, 2, 1, 3))


if __name__ == "__main__":
    key = jax.random.PRNGKey(0)
    k1, k2, k3 = jax.random.split(key, 3)

    # Small shapes consistent with MepoGNN usage:
    # N=batch, C=channels, W=V=num_nodes, L=seq_len.
    N, C, V, W, L = 2, 4, 16, 16, 8
    x = jax.random.normal(k1, (N, C, W, L), dtype=jnp.float32)
    A2 = jax.random.normal(k2, (V, W), dtype=jnp.float32)      # static adjacency
    A3 = jax.random.normal(k3, (N, V, W), dtype=jnp.float32)   # per-sample adjacency

    # 2-D adjacency path: 'vw,ncwl->ncvl'
    out2 = jax.block_until_ready(nconv(x, A2))
    ref2 = jnp.einsum("vw,ncwl->ncvl", A2, x)
    assert out2.shape == (N, C, V, L)
    assert jnp.allclose(out2, ref2, atol=1e-5, rtol=1e-5)

    # 3-D adjacency path: 'nvw,ncwl->ncvl'
    out3 = jax.block_until_ready(nconv(x, A3))
    ref3 = jnp.einsum("nvw,ncwl->ncvl", A3, x)
    assert out3.shape == (N, C, V, L)
    assert jnp.allclose(out3, ref3, atol=1e-5, rtol=1e-5)

    print("KERNEL_OK")
</pallas_src>

<mosaic_0001>
module attributes {stable_mosaic.version = 11 : i64} {
  func.func @_nconv_kernel_shared(%arg0: i32, %arg1: memref<16x16xf32, #tpu.memory_space<vmem>>, %arg2: memref<16x64xf32, #tpu.memory_space<vmem>>, %arg3: memref<16x64xf32, #tpu.memory_space<vmem>>) attributes {dimension_semantics = [#tpu.dimension_semantics<parallel>], iteration_bounds = array<i64: 1>, scalar_prefetch = 0 : i64, scratch_operands = 0 : i64, tpu.core_type = #tpu.core_type<tc>, window_params = [{pipeline_mode = #tpu.pipeline_mode<synchronous>, transform_indices = @transform_0, window_bounds = array<i64: 16, 16>}, {transform_indices = @transform_1, window_bounds = array<i64: 16, 64>}, {transform_indices = @transform_2, window_bounds = array<i64: 16, 64>}]} {
    %c0 = arith.constant 0 : index
    %c0_0 = arith.constant 0 : index
    %0 = vector.load %arg1[%c0, %c0_0] : memref<16x16xf32, #tpu.memory_space<vmem>>, vector<16x16xf32>
    %c0_1 = arith.constant 0 : index
    %c0_2 = arith.constant 0 : index
    %1 = vector.load %arg2[%c0_1, %c0_2] : memref<16x64xf32, #tpu.memory_space<vmem>>, vector<16x64xf32>
    %cst = arith.constant dense<0.000000e+00> : vector<16x64xf32>
    %2 = tpu.matmul %0, %1, %cst {dimension_numbers = #tpu.dot_dimension_numbers<[1], [0], [0], [1], [0, 0, 1, 1], [], []>} : vector<16x16xf32>, vector<16x64xf32>, vector<16x64xf32> -> vector<16x64xf32>
    %c0_3 = arith.constant 0 : index
    %c0_4 = arith.constant 0 : index
    %3 = vector.load %arg3[%c0_3, %c0_4] : memref<16x64xf32, #tpu.memory_space<vmem>>, vector<16x64xf32>
    tpu.vector_store %arg3[%c0_3, %c0_4], %2 {strides = array<i32>} : memref<16x64xf32, #tpu.memory_space<vmem>>, vector<16x64xf32>,
    return
  }
  func.func @transform_0(%arg0: i32) -> (i32, i32) {
    %c0_i32 = arith.constant 0 : i32
    %c0_i32_0 = arith.constant 0 : i32
    %c0_i32_1 = arith.constant 0 : i32
    return %c0_i32, %c0_i32_0 : i32, i32
  }
  func.func @transform_1(%arg0: i32) -> (i32, i32) {
    %c0_i32 = arith.constant 0 : i32
    %c0_i32_0 = arith.constant 0 : i32
    return %c0_i32, %arg0 : i32, i32
  }
  func.func @transform_2(%arg0: i32) -> (i32, i32) {
    %c0_i32 = arith.constant 0 : i32
    %c0_i32_0 = arith.constant 0 : i32
    return %c0_i32, %arg0 : i32, i32
  }
}

</mosaic_0001>

<llo_original>
// kernel: nconv.1
$region0: #{nconv.1}
  #allocation0 [shape = 'u32[]', space=smem, size = 0x4, offset = 0x4, fixed_abs, tag = 'smem constant byte address 0x4 - core index']
  #allocation1 [shape = 'u32[72,128]{1,0:T(1,128)}', space=vmem, size = 0x9000, scoped, tag = 'internal scratch']
  %s0 = inlined_call_operand.vmem [shape: f32[16,16], index: 0, kind: input, shape index: {}]
  %s1 = inlined_call_operand.vmem [shape: f32[16,64], index: 1, kind: input, shape index: {}]
  %s2 = inlined_call_operand.vmem [shape: f32[16,64], index: 2, kind: output, shape index: {}]
  %s3 = sld [smem:[#allocation0]]
  $region18: #{nconv.1} parent=0
    _
  %s5 = ssub.s32 1, %s3
  %s6 = scalar_select 0, %s5, %s3
  // Predicated region
  $region2: #{nconv.1} parent=0 // pred_check
    _
  $region3: #{nconv.1} parent=0 // pred_check_branch
    %8 = sbr.rel (0) target = $region5
  $region4: #{nconv.1} parent=0 // pred_region
    _
  $region5: #{nconv.1} parent=0 // pred_fallthru
    _
  // Predicated region
  $region6: #{nconv.1} parent=0 // pred_check
    _
  $region7: #{nconv.1} parent=0 // pred_check_branch
    %10 = sbr.rel (0) target = $region9
  $region8: #{nconv.1} parent=0 // pred_region
    _
  $region9: #{nconv.1} parent=0 // pred_fallthru
    _
  %v11 = vld [vmem:[%s0] sm:$0xff]
  %v12 = vld [vmem:[%s0 + $0x8] sm:$0xff]
  %v13 = vld [vmem:[%s1] sm:$0xff]
  %v14 = vld [vmem:[%s1 + $0x8] sm:$0xff]
  %vm15 = vcmask 130048
  %v17 = vsel %vm15, %v11, 0
  %v20 = vsel %vm15, %v12, 0
  %22 = vmatpush.msra.mxu0 0.0
  %23 = vmatpush.msra.mxu0 0.0
  %24 = vmatpush.msra.mxu0 0.0
  %25 = vmatpush.msra.mxu0 0.0
  %26 = vmatpush.msra.mxu0 0.0
  %27 = vmatpush.msra.mxu0 0.0
  %28 = vmatpush.msra.mxu0 0.0
  %29 = vmatpush.msra.mxu0 0.0
  %30 = vmatpush.msra.mxu0 0.0
  %31 = vmatpush.msra.mxu0 0.0
  %32 = vmatpush.msra.mxu0 0.0
  %33 = vmatpush.msra.mxu0 0.0
  %34 = vmatpush.msra.mxu0 0.0
  %35 = vmatpush.msra.mxu0 0.0
  %36 = vmatpush.msra.mxu0 %v14
  %37 = vmatpush.msra.mxu0 %v13
  %38 = vmatmul.f32.gmra.mxu0 %v17
  %v39 = vpop.f32.mrf.mxu0
  %v40 = vadd.f32 0.0, %v39
  %41 = vmatmul.f32.gmra.mxu0 %v20
  %v42 = vpop.f32.mrf.mxu0
  %v43 = vadd.f32 0.0, %v42
  %44 = vdwg.mxu0
  %vm45 = vcmask 523264
  %46 = vst.msk [vmem:[%s2] sm:$0xff] %vm45, %v40
  %47 = vst.msk [vmem:[%s2 + $0x8] sm:$0xff] %vm45, %v43
  // Predicated region
  $region10: #{nconv.1} parent=0 // pred_check
    _
  $region11: #{nconv.1} parent=0 // pred_check_branch
    %49 = sbr.rel (0) target = $region13
  $region12: #{nconv.1} parent=0 // pred_region
    _
  $region13: #{nconv.1} parent=0 // pred_fallthru
    _
  // Predicated region
  $region14: #{nconv.1} parent=0 // pred_check
    _
  $region15: #{nconv.1} parent=0 // pred_check_branch
    %51 = sbr.rel (0) target = $region17
  $region16: #{nconv.1} parent=0 // pred_region
    _
  $region17: #{nconv.1} parent=0 // pred_fallthru
    _

</llo_original>
